<compile_context>
chip_gen: v7x
topology: tpu7x:2x2x1
jax: 0.10.0
libtpu: 0.0.40
codegen_flags: <defaults>
</compile_context>

<pallas_src>
import jax
import jax.numpy as jnp
from jax.experimental import pallas as pl
from jax.experimental.pallas import tpu as pltpu

_LANE = 128
_SUBLANE = 8
_NEG_INF = -1e30


def _round_up(x, m):
    return ((x + m - 1) // m) * m


def _cdiv(a, b):
    return -(-a // b)


def _act_dtype_for_device():
    """bf16 tanh on chips with a bf16 EUP (v6e/v7x); f32 otherwise (e.g. v5e)."""
    try:
        kind = jax.devices()[0].device_kind.lower()
    except Exception:
        return jnp.float32
    if ("v6" in kind) or ("v7" in kind):
        return jnp.bfloat16
    return jnp.float32


def _make_kernel(vp, act_dtype):
    """vp: padded vocab size (multiple of 128); act_dtype: tanh compute dtype."""

    def kernel(x_ref,        # [TB, Mp]  f32  meanings (batch tile)
               ws1_ref,      # [Mp, Hp]  bf16 sender layer 1
               bs1_ref,      # [1,  Hp]  f32
               ws2_ref,      # [Hp, Vp]  bf16 sender layer 2 (message logits)
               bs2_ref,      # [1,  Vp]  f32  (padded lanes hold -1e30 -> vocab mask)
               wr1_ref,      # [Vp, Hp]  bf16 receiver layer 1
               br1_ref,      # [1,  Hp]  f32
               wr2_ref,      # [Hp, Mp]  bf16 receiver layer 2 (meaning logits)
               br2_ref,      # [1,  Mp]  f32
               out_ref):     # [TB, Vp+Mp] bf16  packed (msg softmax | meaning logits)
        x = x_ref[...]

        # ---- sender: meaning -> hidden -> message logits -> softmax ----
        h1 = jnp.tanh(
            (jnp.dot(x.astype(jnp.bfloat16), ws1_ref[...],
                     preferred_element_type=jnp.float32)
             + bs1_ref[...]).astype(act_dtype))
        # vocab mask is pre-baked into bs2 (padded weight cols are zero, padded
        # bias lanes are -1e30), so no iota/where is needed here.
        logits = (jnp.dot(h1.astype(jnp.bfloat16), ws2_ref[...],
                          preferred_element_type=jnp.float32)
                  + bs2_ref[...])
        m_max = jnp.max(logits, axis=-1, keepdims=True)
        e = jnp.exp(logits - m_max)
        denom = jnp.sum(e, axis=-1, keepdims=True)
        msg = e * pl.reciprocal(denom, approx=True)

        # ---- receiver: message -> hidden -> meaning logits ----
        h2 = jnp.tanh(
            (jnp.dot(msg.astype(jnp.bfloat16), wr1_ref[...],
                     preferred_element_type=jnp.float32)
             + br1_ref[...]).astype(act_dtype))
        out = (jnp.dot(h2.astype(jnp.bfloat16), wr2_ref[...],
                       preferred_element_type=jnp.float32)
               + br2_ref[...])

        # two lane-aligned unmasked stores (vp and Mp are multiples of 128)
        out_ref[:, :vp] = msg.astype(out_ref.dtype)
        out_ref[:, vp:] = out.astype(out_ref.dtype)

    return kernel


def prepare_params(params):
    """Pad + cast weights ONCE (hoisted out of the per-call path)."""
    ws1, bs1, ws2, bs2, wr1, br1, wr2, br2 = params
    M, H = ws1.shape
    V = ws2.shape[1]
    Mp, Hp, Vp = _round_up(M, _LANE), _round_up(H, _LANE), _round_up(V, _LANE)

    def pad2(a, rows, cols, dtype):
        a = jnp.asarray(a, dtype)
        return jnp.pad(a, ((0, rows - a.shape[0]), (0, cols - a.shape[1])))

    wdt = jnp.bfloat16  # bf16 weights, f32 accumulation / softmax
    bs2p = pad2(bs2, 1, Vp, jnp.float32)
    if Vp > V:
        # bake the vocab mask into the bias: padded logits == bias == -1e30
        bs2p = bs2p.at[:, V:].set(jnp.float32(_NEG_INF))

    padded = dict(
        ws1=pad2(ws1, Mp, Hp, wdt), bs1=pad2(bs1, 1, Hp, jnp.float32),
        ws2=pad2(ws2, Hp, Vp, wdt), bs2=bs2p,
        wr1=pad2(wr1, Vp, Hp, wdt), br1=pad2(br1, 1, Hp, jnp.float32),
        wr2=pad2(wr2, Hp, Mp, wdt), br2=pad2(br2, 1, Mp, jnp.float32),
    )
    dims = dict(M=M, H=H, V=V, Mp=Mp, Hp=Hp, Vp=Vp)
    return padded, dims


def send_receive_pair(x, padded, dims, *, batch_tile=512, min_steps=2,
                      act_dtype=None):
    """Fused sender->receiver forward.

    x: [B, M] float32 meanings; padded/dims from prepare_params(params).
    Returns (msg [B, V] softmax, out [B, M] receiver meaning logits), float32.
    """
    B, M = x.shape
    assert M == dims["M"]
    Mp, Hp, Vp, V = dims["Mp"], dims["Hp"], dims["Vp"], dims["V"]
    if act_dtype is None:
        act_dtype = _act_dtype_for_device()

    # Batch tiling: pad B only to a sublane multiple, derive the tile from the
    # step count so padding stays small, and keep >= min_steps grid steps when
    # possible (so 'parallel' can shard across v7x's two TensorCores).
    Bp8 = _round_up(max(B, 1), _SUBLANE)
    max_steps = Bp8 // _SUBLANE
    steps = max(_cdiv(Bp8, batch_tile), min(min_steps, max_steps))
    tb = _round_up(_cdiv(Bp8, steps), _SUBLANE)
    steps = _cdiv(Bp8, tb)
    Bp = steps * tb

    xp = jnp.pad(x.astype(jnp.float32), ((0, Bp - B), (0, Mp - M)))

    def resident(shape):
        # weights/biases: constant index_map -> never re-DMA'd; single buffer
        # avoids wasting VMEM on a second copy that is never used.
        return pl.BlockSpec(shape, lambda i: (0, 0),
                            pipeline_mode=pl.Buffered(buffer_count=1))

    mm_terms = Mp * Hp + Hp * Vp + Vp * Hp + Hp * Mp
    flops = 2 * Bp * mm_terms
    transcendentals = Bp * (2 * Hp + Vp)          # 2x tanh + softmax exp
    w_bytes = 2 * mm_terms + 4 * (2 * Hp + Vp + Mp)
    bytes_accessed = Bp * Mp * 4 + w_bytes + Bp * (Vp + Mp) * 2

    out_slab = pl.pallas_call(
        _make_kernel(Vp, act_dtype),
        out_shape=jax.ShapeDtypeStruct((Bp, Vp + Mp), jnp.bfloat16),
        grid=(steps,),
        in_specs=[
            pl.BlockSpec((tb, Mp), lambda i: (i, 0)),   # x tile streams per step
            resident((Mp, Hp)), resident((1, Hp)),
            resident((Hp, Vp)), resident((1, Vp)),
            resident((Vp, Hp)), resident((1, Hp)),
            resident((Hp, Mp)), resident((1, Mp)),
        ],
        out_specs=pl.BlockSpec((tb, Vp + Mp), lambda i: (i, 0)),
        compiler_params=pltpu.CompilerParams(
            dimension_semantics=("parallel",),
            vmem_limit_bytes=32 * 1024 * 1024,
        ),
        cost_estimate=pl.CostEstimate(
            flops=flops,
            transcendentals=transcendentals,
            bytes_accessed=bytes_accessed,
        ),
    )(xp, padded["ws1"], padded["bs1"], padded["ws2"], padded["bs2"],
      padded["wr1"], padded["br1"], padded["wr2"], padded["br2"])

    msg = out_slab[:B, :V].astype(jnp.float32)
    out = out_slab[:B, Vp:Vp + M].astype(jnp.float32)
    return msg, out


def init_params(key, meaning_dim, hidden_dim, vocab_size):
    ks = jax.random.split(key, 4)
    scale = 0.1
    ws1 = scale * jax.random.normal(ks[0], (meaning_dim, hidden_dim), jnp.float32)
    bs1 = jnp.zeros((1, hidden_dim), jnp.float32)
    ws2 = scale * jax.random.normal(ks[1], (hidden_dim, vocab_size), jnp.float32)
    bs2 = jnp.zeros((1, vocab_size), jnp.float32)
    wr1 = scale * jax.random.normal(ks[2], (vocab_size, hidden_dim), jnp.float32)
    br1 = jnp.zeros((1, hidden_dim), jnp.float32)
    wr2 = scale * jax.random.normal(ks[3], (hidden_dim, meaning_dim), jnp.float32)
    br2 = jnp.zeros((1, meaning_dim), jnp.float32)
    return (ws1, bs1, ws2, bs2, wr1, br1, wr2, br2)


def _reference(x, params):
    """Pure-JAX reference mirroring the kernel's bf16 weight/activation quantization."""
    ws1, bs1, ws2, bs2, wr1, br1, wr2, br2 = params
    q = lambda a: a.astype(jnp.bfloat16).astype(jnp.float32)
    h1 = jnp.tanh(x @ q(ws1) + bs1)
    logits = q(h1) @ q(ws2) + bs2
    msg = jax.nn.softmax(logits, axis=-1)
    h2 = jnp.tanh(q(msg) @ q(wr1) + br1)
    out = q(h2) @ q(wr2) + br2
    return msg, out


if __name__ == "__main__":
    key = jax.random.PRNGKey(0)
    k_x, k_p = jax.random.split(key)

    B, M, H, V = 16, 32, 32, 16  # batch, meaning dim, hidden, message vocab
    x = jax.random.normal(k_x, (B, M), jnp.float32)
    params = init_params(k_p, M, H, V)

    padded, dims = prepare_params(params)       # pad/cast weights once
    msg, out = send_receive_pair(x, padded, dims)
    jax.block_until_ready((msg, out))

    assert msg.shape == (B, V) and out.shape == (B, M)
    # message rows are (approximately, bf16 output + approx reciprocal) a softmax
    assert jnp.allclose(jnp.sum(msg, axis=-1), 1.0, atol=2e-2)

    # loose check against a pure-JAX reference (bf16 activations + approx rcp
    # in the kernel introduce small differences)
    ref_msg, ref_out = _reference(x, params)
    assert jnp.allclose(msg, ref_msg, atol=5e-2, rtol=5e-2)
    assert jnp.allclose(out, ref_out, atol=5e-2, rtol=5e-2)

    print("KERNEL_OK")
</pallas_src>

<mosaic_0001>
module attributes {stable_mosaic.version = 11 : i64} {
  func.func @kernel(%arg0: i32, %arg1: memref<8x128xf32, #tpu.memory_space<vmem>>, %arg2: memref<128x128xbf16, #tpu.memory_space<vmem>>, %arg3: memref<1x128xf32, #tpu.memory_space<vmem>>, %arg4: memref<128x128xbf16, #tpu.memory_space<vmem>>, %arg5: memref<1x128xf32, #tpu.memory_space<vmem>>, %arg6: memref<128x128xbf16, #tpu.memory_space<vmem>>, %arg7: memref<1x128xf32, #tpu.memory_space<vmem>>, %arg8: memref<128x128xbf16, #tpu.memory_space<vmem>>, %arg9: memref<1x128xf32, #tpu.memory_space<vmem>>, %arg10: memref<8x256xbf16, #tpu.memory_space<vmem>>) attributes {dimension_semantics = [#tpu.dimension_semantics<parallel>], iteration_bounds = array<i64: 2>, scalar_prefetch = 0 : i64, scratch_operands = 0 : i64, tpu.core_type = #tpu.core_type<tc>, window_params = [{transform_indices = @transform_0, window_bounds = array<i64: 8, 128>}, {pipeline_mode = #tpu.pipeline_mode<synchronous>, transform_indices = @transform_1, window_bounds = array<i64: 128, 128>}, {pipeline_mode = #tpu.pipeline_mode<synchronous>, transform_indices = @transform_2, window_bounds = array<i64: 1, 128>}, {pipeline_mode = #tpu.pipeline_mode<synchronous>, transform_indices = @transform_3, window_bounds = array<i64: 128, 128>}, {pipeline_mode = #tpu.pipeline_mode<synchronous>, transform_indices = @transform_4, window_bounds = array<i64: 1, 128>}, {pipeline_mode = #tpu.pipeline_mode<synchronous>, transform_indices = @transform_5, window_bounds = array<i64: 128, 128>}, {pipeline_mode = #tpu.pipeline_mode<synchronous>, transform_indices = @transform_6, window_bounds = array<i64: 1, 128>}, {pipeline_mode = #tpu.pipeline_mode<synchronous>, transform_indices = @transform_7, window_bounds = array<i64: 128, 128>}, {pipeline_mode = #tpu.pipeline_mode<synchronous>, transform_indices = @transform_8, window_bounds = array<i64: 1, 128>}, {transform_indices = @transform_9, window_bounds = array<i64: 8, 256>}]} {
    %c0 = arith.constant 0 : index
    %c0_0 = arith.constant 0 : index
    %0 = vector.load %arg1[%c0, %c0_0] : memref<8x128xf32, #tpu.memory_space<vmem>>, vector<8x128xf32>
    %1 = arith.truncf %0 : vector<8x128xf32> to vector<8x128xbf16>
    %c0_1 = arith.constant 0 : index
    %c0_2 = arith.constant 0 : index
    %2 = vector.load %arg2[%c0_1, %c0_2] : memref<128x128xbf16, #tpu.memory_space<vmem>>, vector<128x128xbf16>
    %cst = arith.constant dense<0.000000e+00> : vector<8x128xf32>
    %3 = tpu.matmul %1, %2, %cst {dimension_numbers = #tpu.dot_dimension_numbers<[1], [0], [0], [1], [0, 0, 1, 1], [], []>} : vector<8x128xbf16>, vector<128x128xbf16>, vector<8x128xf32> -> vector<8x128xf32>
    %c0_3 = arith.constant 0 : index
    %c0_4 = arith.constant 0 : index
    %4 = vector.load %arg3[%c0_3, %c0_4] : memref<1x128xf32, #tpu.memory_space<vmem>>, vector<1x128xf32>
    %5 = vector.broadcast %4 : vector<1x128xf32> to vector<8x128xf32>
    %6 = arith.addf %3, %5 : vector<8x128xf32>
    %7 = math.tanh %6 : vector<8x128xf32>
    %8 = arith.truncf %7 : vector<8x128xf32> to vector<8x128xbf16>
    %c0_5 = arith.constant 0 : index
    %c0_6 = arith.constant 0 : index
    %9 = vector.load %arg4[%c0_5, %c0_6] : memref<128x128xbf16, #tpu.memory_space<vmem>>, vector<128x128xbf16>
    %cst_7 = arith.constant dense<0.000000e+00> : vector<8x128xf32>
    %10 = tpu.matmul %8, %9, %cst_7 {dimension_numbers = #tpu.dot_dimension_numbers<[1], [0], [0], [1], [0, 0, 1, 1], [], []>} : vector<8x128xbf16>, vector<128x128xbf16>, vector<8x128xf32> -> vector<8x128xf32>
    %c0_8 = arith.constant 0 : index
    %c0_9 = arith.constant 0 : index
    %11 = vector.load %arg5[%c0_8, %c0_9] : memref<1x128xf32, #tpu.memory_space<vmem>>, vector<1x128xf32>
    %12 = vector.broadcast %11 : vector<1x128xf32> to vector<8x128xf32>
    %13 = arith.addf %10, %12 : vector<8x128xf32>
    %cst_10 = arith.constant dense<0xFF800000> : vector<8xf32>
    %14 = vector.multi_reduction <maximumf>, %13, %cst_10 [1] : vector<8x128xf32> to vector<8xf32>
    %15 = vector.shape_cast %14 : vector<8xf32> to vector<8x1xf32>
    %16 = vector.broadcast %15 : vector<8x1xf32> to vector<8x128xf32>
    %17 = arith.subf %13, %16 : vector<8x128xf32>
    %18 = math.exp %17 : vector<8x128xf32>
    %cst_11 = arith.constant dense<0.000000e+00> : vector<8xf32>
    %19 = vector.multi_reduction <add>, %18, %cst_11 [1] : vector<8x128xf32> to vector<8xf32>
    %20 = vector.shape_cast %19 : vector<8xf32> to vector<8x1xf32>
    %21 = tpu.reciprocal %20 {approx = true} : vector<8x1xf32> -> vector<8x1xf32>
    %22 = vector.broadcast %21 : vector<8x1xf32> to vector<8x128xf32>
    %23 = arith.mulf %18, %22 : vector<8x128xf32>
    %24 = arith.truncf %23 : vector<8x128xf32> to vector<8x128xbf16>
    %c0_12 = arith.constant 0 : index
    %c0_13 = arith.constant 0 : index
    %25 = vector.load %arg6[%c0_12, %c0_13] : memref<128x128xbf16, #tpu.memory_space<vmem>>, vector<128x128xbf16>
    %cst_14 = arith.constant dense<0.000000e+00> : vector<8x128xf32>
    %26 = tpu.matmul %24, %25, %cst_14 {dimension_numbers = #tpu.dot_dimension_numbers<[1], [0], [0], [1], [0, 0, 1, 1], [], []>} : vector<8x128xbf16>, vector<128x128xbf16>, vector<8x128xf32> -> vector<8x128xf32>
    %c0_15 = arith.constant 0 : index
    %c0_16 = arith.constant 0 : index
    %27 = vector.load %arg7[%c0_15, %c0_16] : memref<1x128xf32, #tpu.memory_space<vmem>>, vector<1x128xf32>
    %28 = vector.broadcast %27 : vector<1x128xf32> to vector<8x128xf32>
    %29 = arith.addf %26, %28 : vector<8x128xf32>
    %30 = math.tanh %29 : vector<8x128xf32>
    %31 = arith.truncf %30 : vector<8x128xf32> to vector<8x128xbf16>
    %c0_17 = arith.constant 0 : index
    %c0_18 = arith.constant 0 : index
    %32 = vector.load %arg8[%c0_17, %c0_18] : memref<128x128xbf16, #tpu.memory_space<vmem>>, vector<128x128xbf16>
    %cst_19 = arith.constant dense<0.000000e+00> : vector<8x128xf32>
    %33 = tpu.matmul %31, %32, %cst_19 {dimension_numbers = #tpu.dot_dimension_numbers<[1], [0], [0], [1], [0, 0, 1, 1], [], []>} : vector<8x128xbf16>, vector<128x128xbf16>, vector<8x128xf32> -> vector<8x128xf32>
    %c0_20 = arith.constant 0 : index
    %c0_21 = arith.constant 0 : index
    %34 = vector.load %arg9[%c0_20, %c0_21] : memref<1x128xf32, #tpu.memory_space<vmem>>, vector<1x128xf32>
    %35 = vector.broadcast %34 : vector<1x128xf32> to vector<8x128xf32>
    %36 = arith.addf %33, %35 : vector<8x128xf32>
    %37 = arith.truncf %23 : vector<8x128xf32> to vector<8x128xbf16>
    %c0_22 = arith.constant 0 : index
    %c0_23 = arith.constant 0 : index
    %38 = vector.load %arg10[%c0_22, %c0_23] : memref<8x256xbf16, #tpu.memory_space<vmem>>, vector<8x128xbf16>
    tpu.vector_store %arg10[%c0_22, %c0_23], %37 {strides = array<i32>} : memref<8x256xbf16, #tpu.memory_space<vmem>>, vector<8x128xbf16>,
    %39 = arith.truncf %36 : vector<8x128xf32> to vector<8x128xbf16>
    %c0_24 = arith.constant 0 : index
    %c128 = arith.constant 128 : index
    %40 = vector.load %arg10[%c0_24, %c128] : memref<8x256xbf16, #tpu.memory_space<vmem>>, vector<8x128xbf16>
    tpu.vector_store %arg10[%c0_24, %c128], %39 {strides = array<i32>} : memref<8x256xbf16, #tpu.memory_space<vmem>>, vector<8x128xbf16>,
    return
  }
  func.func @transform_0(%arg0: i32) -> (i32, i32) {
    %c0_i32 = arith.constant 0 : i32
    %c0_i32_0 = arith.constant 0 : i32
    return %arg0, %c0_i32 : i32, i32
  }
  func.func @transform_1(%arg0: i32) -> (i32, i32) {
    %c0_i32 = arith.constant 0 : i32
    %c0_i32_0 = arith.constant 0 : i32
    %c0_i32_1 = arith.constant 0 : i32
    return %c0_i32, %c0_i32_0 : i32, i32
  }
  func.func @transform_2(%arg0: i32) -> (i32, i32) {
    %c0_i32 = arith.constant 0 : i32
    %c0_i32_0 = arith.constant 0 : i32
    %c0_i32_1 = arith.constant 0 : i32
    return %c0_i32, %c0_i32_0 : i32, i32
  }
  func.func @transform_3(%arg0: i32) -> (i32, i32) {
    %c0_i32 = arith.constant 0 : i32
    %c0_i32_0 = arith.constant 0 : i32
    %c0_i32_1 = arith.constant 0 : i32
    return %c0_i32, %c0_i32_0 : i32, i32
  }
  func.func @transform_4(%arg0: i32) -> (i32, i32) {
    %c0_i32 = arith.constant 0 : i32
    %c0_i32_0 = arith.constant 0 : i32
    %c0_i32_1 = arith.constant 0 : i32
    return %c0_i32, %c0_i32_0 : i32, i32
  }
  func.func @transform_5(%arg0: i32) -> (i32, i32) {
    %c0_i32 = arith.constant 0 : i32
    %c0_i32_0 = arith.constant 0 : i32
    %c0_i32_1 = arith.constant 0 : i32
    return %c0_i32, %c0_i32_0 : i32, i32
  }
  func.func @transform_6(%arg0: i32) -> (i32, i32) {
    %c0_i32 = arith.constant 0 : i32
    %c0_i32_0 = arith.constant 0 : i32
    %c0_i32_1 = arith.constant 0 : i32
    return %c0_i32, %c0_i32_0 : i32, i32
  }
  func.func @transform_7(%arg0: i32) -> (i32, i32) {
    %c0_i32 = arith.constant 0 : i32
    %c0_i32_0 = arith.constant 0 : i32
    %c0_i32_1 = arith.constant 0 : i32
    return %c0_i32, %c0_i32_0 : i32, i32
  }
  func.func @transform_8(%arg0: i32) -> (i32, i32) {
    %c0_i32 = arith.constant 0 : i32
    %c0_i32_0 = arith.constant 0 : i32
    %c0_i32_1 = arith.constant 0 : i32
    return %c0_i32, %c0_i32_0 : i32, i32
  }
  func.func @transform_9(%arg0: i32) -> (i32, i32) {
    %c0_i32 = arith.constant 0 : i32
    %c0_i32_0 = arith.constant 0 : i32
    return %arg0, %c0_i32 : i32, i32
  }
}

</mosaic_0001>

<llo_original>
// kernel: tpu_custom_call.1
$region0: #{tpu_custom_call.1}
  #allocation0 [shape = 'u32[]', space=smem, size = 0x4, offset = 0x4, fixed_abs, tag = 'smem constant byte address 0x4 - core index']
  #allocation1 [shape = 'u32[144,128]{1,0:T(1,128)}', space=vmem, size = 0x12000, scoped, tag = 'internal scratch']
  %s0 = inlined_call_operand.hbm [shape: f32[16,128], index: 0, kind: input, shape index: {}]
  %s1 = inlined_call_operand.hbm [shape: bf16[128,128], index: 1, kind: input, shape index: {}]
  %s2 = inlined_call_operand.vmem [shape: f32[1,128], index: 2, kind: input, shape index: {}]
  %s3 = inlined_call_operand.hbm [shape: bf16[128,128], index: 3, kind: input, shape index: {}]
  %s4 = inlined_call_operand.vmem [shape: f32[1,128], index: 4, kind: input, shape index: {}]
  %s5 = inlined_call_operand.hbm [shape: bf16[128,128], index: 5, kind: input, shape index: {}]
  %s6 = inlined_call_operand.vmem [shape: f32[1,128], index: 6, kind: input, shape index: {}]
  %s7 = inlined_call_operand.hbm [shape: bf16[128,128], index: 7, kind: input, shape index: {}]
  %s8 = inlined_call_operand.vmem [shape: f32[1,128], index: 8, kind: input, shape index: {}]
  %s9 = inlined_call_operand.hbm [shape: bf16[16,256], index: 9, kind: output, shape index: {}]
  %s10 = sld [smem:[#allocation0]]
  $region89: #{tpu_custom_call.1} parent=0
    _
  %s12 = ssub.s32 1, %s10
  %s13 = scalar_select 0, %s12, %s10
  $region1: #{tpu_custom_call.1} parent=0
    #allocation2 [shape = 'u8[8192]{0}', space=vmem, size = 0x2000, scoped, tag = 'input window, operand 0']
    #allocation3 [shape = 's32[2]{0}', space=sflag, size = 0x8, scoped, tag = 'scoped memory for tpu_custom_call.1']
    #allocation4 [shape = 's32[2]{0}', space=sflag, size = 0x8, scoped, tag = 'scoped memory for tpu_custom_call.1']
    #allocation5 [shape = 'u8[32768]{0}', space=vmem, size = 0x8000, scoped, tag = 'input window, operand 1, single buffered']
    #allocation6 [shape = 's32[1]{0}', space=sflag, size = 0x4, scoped, tag = 'scoped memory for tpu_custom_call.1']
    #allocation7 [shape = 'u8[32768]{0}', space=vmem, size = 0x8000, scoped, tag = 'input window, operand 3, single buffered']
    #allocation8 [shape = 'u8[32768]{0}', space=vmem, size = 0x8000, scoped, tag = 'input window, operand 5, single buffered']
    #allocation9 [shape = 's32[1]{0}', space=sflag, size = 0x4, scoped, tag = 'scoped memory for tpu_custom_call.1']
    #allocation10 [shape = 'u8[32768]{0}', space=vmem, size = 0x8000, scoped, tag = 'input window, operand 7, single buffered']
    #allocation11 [shape = 'u8[8192]{0}', space=vmem, size = 0x2000, scoped, tag = 'output window, operand 0']
    %14 = vsyncpa [#allocation3], 0
    %s15 = scalar_lea.sflag [#allocation3], 1
    %16 = vsyncpa %s15, 0
    %17 = vsyncpa [#allocation6], 0
    %18 = vsyncpa [#allocation9], 0
    %19 = vsyncpa [#allocation4], 0
    %s20 = scalar_lea.sflag [#allocation4], 1
    %21 = vsyncpa %s20, 0
    loop: start=0, step=1, limit=4
    $region2: #{tpu_custom_call.1} parent=1 // loop_pre_header
      _
    $region3: #{tpu_custom_call.1} parent=1 // loop_header
      %s23 = sphi 0, %s27
      %p24 = scmp.ge.s32.totalorder %s23, 4
      %s33 = sphi 0, %s35
      %s36 = sphi 0, %s33
      %s37 = sphi 0, %s36
      %s53 = sphi 0, %s37
      %s57 = sphi 0, %s57
      %s59 = sphi 0, %s57
      %s60 = sphi 0, %s59
      %s74 = sphi 0, %s60
      %s78 = sphi 0, %s78
      %s80 = sphi 0, %s78
      %s81 = sphi 0, %s80
      %s95 = sphi 0, %s81
      %s99 = sphi 0, %s99
      %s101 = sphi 0, %s99
      %s102 = sphi 0, %s101
      %s116 = sphi 0, %s102
      %s120 = sphi 0, %s120
      %s122 = sphi 0, %s120
      %s123 = sphi 0, %s122
      %s137 = sphi 0, %s123
      %s141 = sphi 0, %s141
      %s143 = sphi 0, %s141
      %s144 = sphi 0, %s143
      %s158 = sphi 0, %s144
      %s162 = sphi 0, %s162
      %s164 = sphi 0, %s162
      %s165 = sphi 0, %s164
      %s179 = sphi 0, %s165
      %s183 = sphi 0, %s183
      %s185 = sphi 0, %s183
      %s186 = sphi 0, %s185
      %s200 = sphi 0, %s186
      %s204 = sphi 0, %s204
      %s206 = sphi 0, %s204
      %s207 = sphi 0, %s206
      %s221 = sphi 0, %s207
      %s227 = sphi 0, %s229
      %s230 = sphi 0, %s227
      %s231 = sphi 0, %s230
      %s247 = sphi 0, %s231
    $region4: #{tpu_custom_call.1} parent=1 // loop_header_branch
      %26 = sbr.rel (%p24) target = $region8
    $region5: #{tpu_custom_call.1} parent=1 // loop_body
      %s28 = ssub.s32 %s23, 1
      %s29 = ssub.s32 %s23, 2
      %s30 = sadd.s32 %s23, 1
      %s31 = ssub.s32 %s23, %s30
      %p32 = scmp.eq.s32.totalorder %s31, 0
      %s34 = sadd.s32 %s33, 1
      %s35 = scalar_select %p32, %s33, %s34
      %p38 = pneg %p32
      %p39 = scmp.eq.s32.totalorder %s23, 1
      %p40 = por %p38, %p39
      %p41 = scmp.ne.s32.totalorder %s33, %s36
      %p42 = scmp.eq.s32.totalorder %s23, 0
      %p43 = por %p41, %p42
      %p44 = scmp.ne.s32.totalorder %s33, %s36
      %p45 = scmp.eq.s32.totalorder %s28, 1
      %p46 = por %p44, %p45
      %p47 = scmp.ne.s32.totalorder %s36, %s37
      %p48 = scmp.eq.s32.totalorder %s28, 0
      %p49 = por %p47, %p48
      %p50 = scmp.ne.s32.totalorder %s36, %s37
      %p51 = scmp.eq.s32.totalorder %s29, 1
      %p52 = por %p50, %p51
      %p54 = scmp.ne.s32.totalorder %s37, %s53
      %p55 = scmp.eq.s32.totalorder %s29, 0
      %p56 = por %p54, %p55
      %s58 = sadd.s32 %s57, 1
      %p61 = scmp.eq.s32.totalorder %s23, 1
      %p62 = scmp.ne.s32.totalorder %s57, %s59
      %p63 = scmp.eq.s32.totalorder %s23, 0
      %p64 = por %p62, %p63
      %p65 = scmp.ne.s32.totalorder %s57, %s59
      %p66 = scmp.eq.s32.totalorder %s28, 1
      %p67 = por %p65, %p66
      %p68 = scmp.ne.s32.totalorder %s59, %s60
      %p69 = scmp.eq.s32.totalorder %s28, 0
      %p70 = por %p68, %p69
      %p71 = scmp.ne.s32.totalorder %s59, %s60
      %p72 = scmp.eq.s32.totalorder %s29, 1
      %p73 = por %p71, %p72
      %p75 = scmp.ne.s32.totalorder %s60, %s74
      %p76 = scmp.eq.s32.totalorder %s29, 0
      %p77 = por %p75, %p76
      %s79 = sadd.s32 %s78, 1
      %p82 = scmp.eq.s32.totalorder %s23, 1
      %p83 = scmp.ne.s32.totalorder %s78, %s80
      %p84 = scmp.eq.s32.totalorder %s23, 0
      %p85 = por %p83, %p84
      %p86 = scmp.ne.s32.totalorder %s78, %s80
      %p87 = scmp.eq.s32.totalorder %s28, 1
      %p88 = por %p86, %p87
      %p89 = scmp.ne.s32.totalorder %s80, %s81
      %p90 = scmp.eq.s32.totalorder %s28, 0
      %p91 = por %p89, %p90
      %p92 = scmp.ne.s32.totalorder %s80, %s81
      %p93 = scmp.eq.s32.totalorder %s29, 1
      %p94 = por %p92, %p93
      %p96 = scmp.ne.s32.totalorder %s81, %s95
      %p97 = scmp.eq.s32.totalorder %s29, 0
      %p98 = por %p96, %p97
      %s100 = sadd.s32 %s99, 1
      %p103 = scmp.eq.s32.totalorder %s23, 1
      %p104 = scmp.ne.s32.totalorder %s99, %s101
      %p105 = scmp.eq.s32.totalorder %s23, 0
      %p106 = por %p104, %p105
      %p107 = scmp.ne.s32.totalorder %s99, %s101
      %p108 = scmp.eq.s32.totalorder %s28, 1
      %p109 = por %p107, %p108
      %p110 = scmp.ne.s32.totalorder %s101, %s102
      %p111 = scmp.eq.s32.totalorder %s28, 0
      %p112 = por %p110, %p111
      %p113 = scmp.ne.s32.totalorder %s101, %s102
      %p114 = scmp.eq.s32.totalorder %s29, 1
      %p115 = por %p113, %p114
      %p117 = scmp.ne.s32.totalorder %s102, %s116
      %p118 = scmp.eq.s32.totalorder %s29, 0
      %p119 = por %p117, %p118
      %s121 = sadd.s32 %s120, 1
      %p124 = scmp.eq.s32.totalorder %s23, 1
      %p125 = scmp.ne.s32.totalorder %s120, %s122
      %p126 = scmp.eq.s32.totalorder %s23, 0
      %p127 = por %p125, %p126
      %p128 = scmp.ne.s32.totalorder %s120, %s122
      %p129 = scmp.eq.s32.totalorder %s28, 1
      %p130 = por %p128, %p129
      %p131 = scmp.ne.s32.totalorder %s122, %s123
      %p132 = scmp.eq.s32.totalorder %s28, 0
      %p133 = por %p131, %p132
      %p134 = scmp.ne.s32.totalorder %s122, %s123
      %p135 = scmp.eq.s32.totalorder %s29, 1
      %p136 = por %p134, %p135
      %p138 = scmp.ne.s32.totalorder %s123, %s137
      %p139 = scmp.eq.s32.totalorder %s29, 0
      %p140 = por %p138, %p139
      %s142 = sadd.s32 %s141, 1
      %p145 = scmp.eq.s32.totalorder %s23, 1
      %p146 = scmp.ne.s32.totalorder %s141, %s143
      %p147 = scmp.eq.s32.totalorder %s23, 0
      %p148 = por %p146, %p147
      %p149 = scmp.ne.s32.totalorder %s141, %s143
      %p150 = scmp.eq.s32.totalorder %s28, 1
      %p151 = por %p149, %p150
      %p152 = scmp.ne.s32.totalorder %s143, %s144
      %p153 = scmp.eq.s32.totalorder %s28, 0
      %p154 = por %p152, %p153
      %p155 = scmp.ne.s32.totalorder %s143, %s144
      %p156 = scmp.eq.s32.totalorder %s29, 1
      %p157 = por %p155, %p156
      %p159 = scmp.ne.s32.totalorder %s144, %s158
      %p160 = scmp.eq.s32.totalorder %s29, 0
      %p161 = por %p159, %p160
      %s163 = sadd.s32 %s162, 1
      %p166 = scmp.eq.s32.totalorder %s23, 1
      %p167 = scmp.ne.s32.totalorder %s162, %s164
      %p168 = scmp.eq.s32.totalorder %s23, 0
      %p169 = por %p167, %p168
      %p170 = scmp.ne.s32.totalorder %s162, %s164
      %p171 = scmp.eq.s32.totalorder %s28, 1
      %p172 = por %p170, %p171
      %p173 = scmp.ne.s32.totalorder %s164, %s165
      %p174 = scmp.eq.s32.totalorder %s28, 0
      %p175 = por %p173, %p174
      %p176 = scmp.ne.s32.totalorder %s164, %s165
      %p177 = scmp.eq.s32.totalorder %s29, 1
      %p178 = por %p176, %p177
      %p180 = scmp.ne.s32.totalorder %s165, %s179
      %p181 = scmp.eq.s32.totalorder %s29, 0
      %p182 = por %p180, %p181
      %s184 = sadd.s32 %s183, 1
      %p187 = scmp.eq.s32.totalorder %s23, 1
      %p188 = scmp.ne.s32.totalorder %s183, %s185
      %p189 = scmp.eq.s32.totalorder %s23, 0
      %p190 = por %p188, %p189
      %p191 = scmp.ne.s32.totalorder %s183, %s185
      %p192 = scmp.eq.s32.totalorder %s28, 1
      %p193 = por %p191, %p192
      %p194 = scmp.ne.s32.totalorder %s185, %s186
      %p195 = scmp.eq.s32.totalorder %s28, 0
      %p196 = por %p194, %p195
      %p197 = scmp.ne.s32.totalorder %s185, %s186
      %p198 = scmp.eq.s32.totalorder %s29, 1
      %p199 = por %p197, %p198
      %p201 = scmp.ne.s32.totalorder %s186, %s200
      %p202 = scmp.eq.s32.totalorder %s29, 0
      %p203 = por %p201, %p202
      %s205 = sadd.s32 %s204, 1
      %p208 = scmp.eq.s32.totalorder %s23, 1
      %p209 = scmp.ne.s32.totalorder %s204, %s206
      %p210 = scmp.eq.s32.totalorder %s23, 0
      %p211 = por %p209, %p210
      %p212 = scmp.ne.s32.totalorder %s204, %s206
      %p213 = scmp.eq.s32.totalorder %s28, 1
      %p214 = por %p212, %p213
      %p215 = scmp.ne.s32.totalorder %s206, %s207
      %p216 = scmp.eq.s32.totalorder %s28, 0
      %p217 = por %p215, %p216
      %p218 = scmp.ne.s32.totalorder %s206, %s207
      %p219 = scmp.eq.s32.totalorder %s29, 1
      %p220 = por %p218, %p219
      %p222 = scmp.ne.s32.totalorder %s207, %s221
      %p223 = scmp.eq.s32.totalorder %s29, 0
      %p224 = por %p222, %p223
      %s225 = ssub.s32 %s23, %s30
      %p226 = scmp.eq.s32.totalorder %s225, 0
      %s228 = sadd.s32 %s227, 1
      %s229 = scalar_select %p226, %s227, %s228
      %p232 = pneg %p226
      %p233 = scmp.eq.s32.totalorder %s23, 1
      %p234 = por %p232, %p233
      %p235 = scmp.ne.s32.totalorder %s227, %s230
      %p236 = scmp.eq.s32.totalorder %s23, 0
      %p237 = por %p235, %p236
      %p238 = scmp.ne.s32.totalorder %s227, %s230
      %p239 = scmp.eq.s32.totalorder %s28, 1
      %p240 = por %p238, %p239
      %p241 = scmp.ne.s32.totalorder %s230, %s231
      %p242 = scmp.eq.s32.totalorder %s28, 0
      %p243 = por %p241, %p242
      %p244 = scmp.ne.s32.totalorder %s230, %s231
      %p245 = scmp.eq.s32.totalorder %s29, 1
      %p246 = por %p244, %p245
      %p248 = scmp.ne.s32.totalorder %s231, %s247
      %p249 = scmp.eq.s32.totalorder %s29, 0
      %p250 = por %p248, %p249
      %p251 = scmp.le.s32.totalorder 1, %s23
      %p252 = scmp.lt.s32.totalorder %s23, 3
      %p253 = pnand %p251, %p252
      %p254 = pneg %p253
      // Predicated region
      $region9: #{tpu_custom_call.1} parent=5 // pred_check
        _
      $region10: #{tpu_custom_call.1} parent=5 // pred_check_branch
        %256 = sbr.rel (%p253) target = $region12
      $region11: #{tpu_custom_call.1} parent=5 // pred_region
        %s257 = ssub.s32 %s23, 1
        // Predicated region
        $region13: #{tpu_custom_call.1} parent=11 // pred_check
          %p258 = pneg %p70
        $region14: #{tpu_custom_call.1} parent=11 // pred_check_branch
          %260 = sbr.rel (%p258) target = $region16
        $region15: #{tpu_custom_call.1} parent=11 // pred_region
          %s262 = ssub.s32 1024, 1024
          %263 = vsyncadd [#allocation6], %s262
          %s264 = sshll.u32 [#allocation5], 4
          %s265 = int_to_ptr.vmem [resolvable:$true] %s264
          %270 = dma.hbm_to_vmem [thread:$0]  %s1, 1024, %s265, [#allocation6], 64, 64, 4
        $region16: #{tpu_custom_call.1} parent=11 // pred_fallthru
          _
        // Predicated region
        $region17: #{tpu_custom_call.1} parent=11 // pred_check
          %p271 = pneg %p91
        $region18: #{tpu_custom_call.1} parent=11 // pred_check_branch
          %273 = sbr.rel (%p271) target = $region20
        $region19: #{tpu_custom_call.1} parent=11 // pred_region
          _
        $region20: #{tpu_custom_call.1} parent=11 // pred_fallthru
          _
        // Predicated region
        $region21: #{tpu_custom_call.1} parent=11 // pred_check
          %p274 = pneg %p112
        $region22: #{tpu_custom_call.1} parent=11 // pred_check_branch
          %276 = sbr.rel (%p274) target = $region24
        $region23: #{tpu_custom_call.1} parent=11 // pred_region
          %s278 = ssub.s32 1024, 1024
          %279 = vsyncadd [#allocation6], %s278
          %s280 = sshll.u32 [#allocation7], 4
          %s281 = int_to_ptr.vmem [resolvable:$true] %s280
          %286 = dma.hbm_to_vmem [thread:$0]  %s3, 1024, %s281, [#allocation6], 64, 64, 4
        $region24: #{tpu_custom_call.1} parent=11 // pred_fallthru
          _
        // Predicated region
        $region25: #{tpu_custom_call.1} parent=11 // pred_check
          %p287 = pneg %p133
        $region26: #{tpu_custom_call.1} parent=11 // pred_check_branch
          %289 = sbr.rel (%p287) target = $region28
        $region27: #{tpu_custom_call.1} parent=11 // pred_region
          _
        $region28: #{tpu_custom_call.1} parent=11 // pred_fallthru
          _
        // Predicated region
        $region29: #{tpu_custom_call.1} parent=11 // pred_check
          %p290 = pneg %p154
        $region30: #{tpu_custom_call.1} parent=11 // pred_check_branch
          %292 = sbr.rel (%p290) target = $region32
        $region31: #{tpu_custom_call.1} parent=11 // pred_region
          %s294 = ssub.s32 1024, 1024
          %295 = vsyncadd [#allocation9], %s294
          %s296 = sshll.u32 [#allocation8], 4
          %s297 = int_to_ptr.vmem [resolvable:$true] %s296
          %302 = dma.hbm_to_vmem [thread:$0]  %s5, 1024, %s297, [#allocation9], 64, 64, 4
        $region32: #{tpu_custom_call.1} parent=11 // pred_fallthru
          _
        // Predicated region
        $region33: #{tpu_custom_call.1} parent=11 // pred_check
          %p303 = pneg %p175
        $region34: #{tpu_custom_call.1} parent=11 // pred_check_branch
          %305 = sbr.rel (%p303) target = $region36
        $region35: #{tpu_custom_call.1} parent=11 // pred_region
          _
        $region36: #{tpu_custom_call.1} parent=11 // pred_fallthru
          _
        // Predicated region
        $region37: #{tpu_custom_call.1} parent=11 // pred_check
          %p306 = pneg %p196
        $region38: #{tpu_custom_call.1} parent=11 // pred_check_branch
          %308 = sbr.rel (%p306) target = $region40
        $region39: #{tpu_custom_call.1} parent=11 // pred_region
          %s310 = ssub.s32 1024, 1024
          %311 = vsyncadd [#allocation9], %s310
          %s312 = sshll.u32 [#allocation10], 4
          %s313 = int_to_ptr.vmem [resolvable:$true] %s312
          %318 = dma.hbm_to_vmem [thread:$0]  %s7, 1024, %s313, [#allocation9], 64, 64, 4
        $region40: #{tpu_custom_call.1} parent=11 // pred_fallthru
          _
        // Predicated region
        $region41: #{tpu_custom_call.1} parent=11 // pred_check
          %p319 = pneg %p217
        $region42: #{tpu_custom_call.1} parent=11 // pred_check_branch
          %321 = sbr.rel (%p319) target = $region44
        $region43: #{tpu_custom_call.1} parent=11 // pred_region
          _
        $region44: #{tpu_custom_call.1} parent=11 // pred_fallthru
          _
      $region12: #{tpu_custom_call.1} parent=5 // pred_fallthru
        _
      %p322 = scmp.lt.s32.totalorder %s23, 2
      // Predicated region
      $region45: #{tpu_custom_call.1} parent=5 // pred_check
        %p323 = pneg %p322
      $region46: #{tpu_custom_call.1} parent=5 // pred_check_branch
        %325 = sbr.rel (%p323) target = $region48
      $region47: #{tpu_custom_call.1} parent=5 // pred_region
        // Predicated region
        $region49: #{tpu_custom_call.1} parent=47 // pred_check
          %p326 = pneg %p43
        $region50: #{tpu_custom_call.1} parent=47 // pred_check_branch
          %328 = sbr.rel (%p326) target = $region52
        $region51: #{tpu_custom_call.1} parent=47 // pred_region
          %s329 = sand.u32 %s33, 1
          %s330 = scalar_lea.sflag [#allocation3], %s329
          %s331 = sand.u32 %s33, 1
          %s332 = smul.addr %s331, 8
          %s333 = scalar_lea.vmem [#allocation2], %s332
          %s335 = ssub.s32 128, 128
          %336 = vsyncadd %s330, %s335
          %s337 = smul.addr %s23, 128
          %s338 = scalar_lea.hbm %s0, %s337
          %s340 = sshll.u32 %s333, 4
          %s341 = int_to_ptr.vmem [resolvable:$true] %s340
          %343 = dma.hbm_to_vmem [thread:$0]  %s338, 128, %s341, %s330
        $region52: #{tpu_custom_call.1} parent=47 // pred_fallthru
          _
      $region48: #{tpu_custom_call.1} parent=5 // pred_fallthru
        _
      %p344 = scmp.le.s32.totalorder 1, %s23
      %p345 = scmp.lt.s32.totalorder %s23, 3
      %p346 = pnand %p344, %p345
      %p347 = pneg %p346
      // Predicated region
      $region53: #{tpu_custom_call.1} parent=5 // pred_check
        _
      $region54: #{tpu_custom_call.1} parent=5 // pred_check_branch
        %349 = sbr.rel (%p346) target = $region56
      $region55: #{tpu_custom_call.1} parent=5 // pred_region
        %s350 = ssub.s32 %s23, 1
        %s351 = sand.u32 %s36, 1
        %s352 = scalar_lea.sflag [#allocation3], %s351
        %s353 = sand.u32 %s36, 1
        %s354 = smul.addr %s353, 8
        %s355 = scalar_lea.vmem [#allocation2], %s354
        // Predicated region
        $region57: #{tpu_custom_call.1} parent=55 // pred_check
          %p356 = pneg %p49
        $region58: #{tpu_custom_call.1} parent=55 // pred_check_branch
          %358 = sbr.rel (%p356) target = $region60
        $region59: #{tpu_custom_call.1} parent=55 // pred_region
          %359 = dma.done %s352, 128
        $region60: #{tpu_custom_call.1} parent=55 // pred_fallthru
          _
        // Predicated region
        $region61: #{tpu_custom_call.1} parent=55 // pred_check
          %p360 = pneg %p70
        $region62: #{tpu_custom_call.1} parent=55 // pred_check_branch
          %362 = sbr.rel (%p360) target = $region64
        $region63: #{tpu_custom_call.1} parent=55 // pred_region
          %363 = dma.done [#allocation6], 1024
        $region64: #{tpu_custom_call.1} parent=55 // pred_fallthru
          _
        // Predicated region
        $region65: #{tpu_custom_call.1} parent=55 // pred_check
          %p364 = pneg %p112
        $region66: #{tpu_custom_call.1} parent=55 // pred_check_branch
          %366 = sbr.rel (%p364) target = $region68
        $region67: #{tpu_custom_call.1} parent=55 // pred_region
          %367 = dma.done [#allocation6], 1024
        $region68: #{tpu_custom_call.1} parent=55 // pred_fallthru
          _
        // Predicated region
        $region69: #{tpu_custom_call.1} parent=55 // pred_check
          %p368 = pneg %p154
        $region70: #{tpu_custom_call.1} parent=55 // pred_check_branch
          %370 = sbr.rel (%p368) target = $region72
        $region71: #{tpu_custom_call.1} parent=55 // pred_region
          %371 = dma.done [#allocation9], 1024
        $region72: #{tpu_custom_call.1} parent=55 // pred_fallthru
          _
        // Predicated region
        $region73: #{tpu_custom_call.1} parent=55 // pred_check
          %p372 = pneg %p196
        $region74: #{tpu_custom_call.1} parent=55 // pred_check_branch
          %374 = sbr.rel (%p372) target = $region76
        $region75: #{tpu_custom_call.1} parent=55 // pred_region
          %375 = dma.done [#allocation9], 1024
        $region76: #{tpu_custom_call.1} parent=55 // pred_fallthru
          _
        %s376 = sand.u32 %s36, 1
        %s377 = scalar_lea.sflag [#allocation3], %s376
        %s378 = sand.u32 %s36, 1
        %s379 = smul.addr %s378, 8
        %s380 = scalar_lea.vmem [#allocation2], %s379
        %p381 = pneg %p49
        %p382 = pneg %p46
        %p383 = pneg %p70
        %p384 = pneg %p67
        %p385 = pneg %p91
        %p386 = pneg %p88
        %p387 = pneg %p112
        %p388 = pneg %p109
        %p389 = pneg %p133
        %p390 = pneg %p130
        %p391 = pneg %p154
        %p392 = pneg %p151
        %p393 = pneg %p175
        %p394 = pneg %p172
        %p395 = pneg %p196
        %p396 = pneg %p193
        %p397 = pneg %p217
        %p398 = pneg %p214
        %p399 = pneg %p243
        %p400 = pneg %p240
        %s401 = sand.u32 %s230, 1
        %s402 = scalar_lea.sflag [#allocation4], %s401
        %s403 = sand.u32 %s230, 1
        %s404 = smul.addr %s403, 8
        %s405 = scalar_lea.vmem [#allocation11], %s404
        %v407 = vld [vmem:[%s355] sm:$0xff]
        %v408 = vpack.c.bf16 %v407, %v407
        %v409 = vld [vmem:[#allocation5] sm:$0xf]
        %v410 = vld [vmem:[#allocation5 + $0x4] sm:$0xf]
        %v411 = vld [vmem:[#allocation5 + $0x8] sm:$0xf]
        %v412 = vld [vmem:[#allocation5 + $0xc] sm:$0xf]
        %v413 = vld [vmem:[#allocation5 + $0x10] sm:$0xf]
        %v414 = vld [vmem:[#allocation5 + $0x14] sm:$0xf]
        %v415 = vld [vmem:[#allocation5 + $0x18] sm:$0xf]
        %v416 = vld [vmem:[#allocation5 + $0x1c] sm:$0xf]
        %v417 = vld [vmem:[#allocation5 + $0x20] sm:$0xf]
        %v418 = vld [vmem:[#allocation5 + $0x24] sm:$0xf]
        %v419 = vld [vmem:[#allocation5 + $0x28] sm:$0xf]
        %v420 = vld [vmem:[#allocation5 + $0x2c] sm:$0xf]
        %v421 = vld [vmem:[#allocation5 + $0x30] sm:$0xf]
        %v422 = vld [vmem:[#allocation5 + $0x34] sm:$0xf]
        %v423 = vld [vmem:[#allocation5 + $0x38] sm:$0xf]
        %v424 = vld [vmem:[#allocation5 + $0x3c] sm:$0xf]
        %v425 = vld [vmem:[%s2] sm:$0x1]
        %v427 = vlaneseq
        %v428 = vshrl.u32 %v427, 7
        %v429 = vsub.s32 0, %v428
        %v430 = vrot.slane %v425, %v429
        %v448 = vunpack.c.l.b16 %v409
        %v449 = vunpack.c.l.b16 %v410
        %v450 = vunpack.c.l.b16 %v411
        %v451 = vunpack.c.l.b16 %v412
        %v452 = vunpack.c.l.b16 %v413
        %v453 = vunpack.c.l.b16 %v414
        %v454 = vunpack.c.l.b16 %v415
        %v455 = vunpack.c.l.b16 %v416
        %v456 = vunpack.c.l.b16 %v417
        %v457 = vunpack.c.l.b16 %v418
        %v458 = vunpack.c.l.b16 %v419
        %v459 = vunpack.c.l.b16 %v420
        %v460 = vunpack.c.l.b16 %v421
        %v461 = vunpack.c.l.b16 %v422
        %v462 = vunpack.c.l.b16 %v423
        %v463 = vunpack.c.l.b16 %v424
        %v464 = vpack.c.b16 %v449, %v448
        %v465 = vpack.c.b16 %v451, %v450
        %v466 = vpack.c.b16 %v453, %v452
        %v467 = vpack.c.b16 %v455, %v454
        %v468 = vpack.c.b16 %v457, %v456
        %v469 = vpack.c.b16 %v459, %v458
        %v470 = vpack.c.b16 %v461, %v460
        %v471 = vpack.c.b16 %v463, %v462
        %480 = vmatprep.subr.bf16.mxu0 0
        %481 = vmatpush1.bf16.msra.mxu0 %v464
        %482 = vmatprep.subr.bf16.mxu0 0
        %483 = vmatpush1.bf16.msra.mxu0 %v465
        %484 = vmatprep.subr.bf16.mxu0 0
        %485 = vmatpush1.bf16.msra.mxu0 %v466
        %486 = vmatprep.subr.bf16.mxu0 0
        %487 = vmatpush1.bf16.msra.mxu0 %v467
        %488 = vmatprep.subr.bf16.mxu0 0
        %489 = vmatpush1.bf16.msra.mxu0 %v468
        %490 = vmatprep.subr.bf16.mxu0 0
        %491 = vmatpush1.bf16.msra.mxu0 %v469
        %492 = vmatprep.subr.bf16.mxu0 0
        %493 = vmatpush1.bf16.msra.mxu0 %v470
        %494 = vmatprep.subr.bf16.mxu0 0
        %495 = vmatpush1.bf16.msra.mxu0 %v471
        %496 = vmatprep.subr.bf16.mxu0 0
        %497 = vmatpush1.bf16.msra.mxu0 0
        %498 = vmatprep.subr.bf16.mxu0 0
        %499 = vmatpush1.bf16.msra.mxu0 0
        %500 = vmatprep.subr.bf16.mxu0 0
        %501 = vmatpush1.bf16.msra.mxu0 0
        %502 = vmatprep.subr.bf16.mxu0 0
        %503 = vmatpush1.bf16.msra.mxu0 0
        %504 = vmatprep.subr.bf16.mxu0 0
        %505 = vmatpush1.bf16.msra.mxu0 0
        %506 = vmatprep.subr.bf16.mxu0 0
        %507 = vmatpush1.bf16.msra.mxu0 0
        %508 = vmatprep.subr.bf16.mxu0 0
        %509 = vmatpush1.bf16.msra.mxu0 0
        %510 = vmatprep.subr.bf16.mxu0 0
        %511 = vmatpush1.bf16.msra.mxu0 0
        %512 = vmatprep.mubr.bf16.mxu0 0
        %513 = vmatmul.mubr.bf16.gmra.mrb[0].mxu0 %v408
        %v514 = vpop.f32.mrb[0].mxu0
        %v515 = vadd.f32 %v430, %v514
        %v516 = vpop.f32.mrb[0].mxu0
        %v517 = vpop.f32.mrb[0].mxu0
        %v518 = vpop.f32.mrb[0].mxu0
        %519 = vdwg.mxu0
        %v520 = vtanh.pop %v515
        %v521 = vpack.c.bf16 %v520, %v520
        %v522 = vld [vmem:[#allocation7] sm:$0xf]
        %v523 = vld [vmem:[#allocation7 + $0x4] sm:$0xf]
        %v524 = vld [vmem:[#allocation7 + $0x8] sm:$0xf]
        %v525 = vld [vmem:[#allocation7 + $0xc] sm:$0xf]
        %v526 = vld [vmem:[#allocation7 + $0x10] sm:$0xf]
        %v527 = vld [vmem:[#allocation7 + $0x14] sm:$0xf]
        %v528 = vld [vmem:[#allocation7 + $0x18] sm:$0xf]
        %v529 = vld [vmem:[#allocation7 + $0x1c] sm:$0xf]
        %v530 = vld [vmem:[#allocation7 + $0x20] sm:$0xf]
        %v531 = vld [vmem:[#allocation7 + $0x24] sm:$0xf]
        %v532 = vld [vmem:[#allocation7 + $0x28] sm:$0xf]
        %v533 = vld [vmem:[#allocation7 + $0x2c] sm:$0xf]
        %v534 = vld [vmem:[#allocation7 + $0x30] sm:$0xf]
        %v535 = vld [vmem:[#allocation7 + $0x34] sm:$0xf]
        %v536 = vld [vmem:[#allocation7 + $0x38] sm:$0xf]
        %v537 = vld [vmem:[#allocation7 + $0x3c] sm:$0xf]
        %v538 = vld [vmem:[%s4] sm:$0x1]
        %v540 = vlaneseq
        %v541 = vshrl.u32 %v540, 7
        %v542 = vsub.s32 0, %v541
        %v543 = vrot.slane %v538, %v542
        %v561 = vunpack.c.l.b16 %v522
        %v562 = vunpack.c.l.b16 %v523
        %v563 = vunpack.c.l.b16 %v524
        %v564 = vunpack.c.l.b16 %v525
        %v565 = vunpack.c.l.b16 %v526
        %v566 = vunpack.c.l.b16 %v527
        %v567 = vunpack.c.l.b16 %v528
        %v568 = vunpack.c.l.b16 %v529
        %v569 = vunpack.c.l.b16 %v530
        %v570 = vunpack.c.l.b16 %v531
        %v571 = vunpack.c.l.b16 %v532
        %v572 = vunpack.c.l.b16 %v533
        %v573 = vunpack.c.l.b16 %v534
        %v574 = vunpack.c.l.b16 %v535
        %v575 = vunpack.c.l.b16 %v536
        %v576 = vunpack.c.l.b16 %v537
        %v577 = vpack.c.b16 %v562, %v561
        %v578 = vpack.c.b16 %v564, %v563
        %v579 = vpack.c.b16 %v566, %v565
        %v580 = vpack.c.b16 %v568, %v567
        %v581 = vpack.c.b16 %v570, %v569
        %v582 = vpack.c.b16 %v572, %v571
        %v583 = vpack.c.b16 %v574, %v573
        %v584 = vpack.c.b16 %v576, %v575
        %593 = vmatprep.subr.bf16.mxu0 0
        %594 = vmatpush1.bf16.msra.mxu0 %v577
        %595 = vmatprep.subr.bf16.mxu0 0
        %596 = vmatpush1.bf16.msra.mxu0 %v578
        %597 = vmatprep.subr.bf16.mxu0 0
        %598 = vmatpush1.bf16.msra.mxu0 %v579
        %599 = vmatprep.subr.bf16.mxu0 0
        %600 = vmatpush1.bf16.msra.mxu0 %v580
        %601 = vmatprep.subr.bf16.mxu0 0
        %602 = vmatpush1.bf16.msra.mxu0 %v581
        %603 = vmatprep.subr.bf16.mxu0 0
        %604 = vmatpush1.bf16.msra.mxu0 %v582
        %605 = vmatprep.subr.bf16.mxu0 0
        %606 = vmatpush1.bf16.msra.mxu0 %v583
        %607 = vmatprep.subr.bf16.mxu0 0
        %608 = vmatpush1.bf16.msra.mxu0 %v584
        %609 = vmatprep.subr.bf16.mxu0 0
        %610 = vmatpush1.bf16.msra.mxu0 0
        %611 = vmatprep.subr.bf16.mxu0 0
        %612 = vmatpush1.bf16.msra.mxu0 0
        %613 = vmatprep.subr.bf16.mxu0 0
        %614 = vmatpush1.bf16.msra.mxu0 0
        %615 = vmatprep.subr.bf16.mxu0 0
        %616 = vmatpush1.bf16.msra.mxu0 0
        %617 = vmatprep.subr.bf16.mxu0 0
        %618 = vmatpush1.bf16.msra.mxu0 0
        %619 = vmatprep.subr.bf16.mxu0 0
        %620 = vmatpush1.bf16.msra.mxu0 0
        %621 = vmatprep.subr.bf16.mxu0 0
        %622 = vmatpush1.bf16.msra.mxu0 0
        %623 = vmatprep.subr.bf16.mxu0 0
        %624 = vmatpush1.bf16.msra.mxu0 0
        %625 = vmatprep.mubr.bf16.mxu0 0
        %626 = vmatmul.mubr.bf16.gmra.mrb[0].mxu0 %v521
        %v627 = vpop.f32.mrb[0].mxu0
        %v628 = vadd.f32 %v543, %v627
        %v629 = vpop.f32.mrb[0].mxu0
        %v630 = vpop.f32.mrb[0].mxu0
        %v631 = vpop.f32.mrb[0].mxu0
        %632 = vdwg.mxu0
        %633 = vmax.xlane.f32.xlu0 %v628
        %v634 = vpop.xlane.xlu0 %633
        %v635 = vsub.f32 %v628, %v634
        %v636 = vmul.f32 %v635, 1.442695
        %v637 = vpow.pop %v636
        %638 = vadd.xlane.f32.xlu0 %v637
        %v639 = vpop.xlane.xlu0 %638
        %v640 = vrcp.pop %v639
        %v641 = vmul.f32 %v637, %v640
        %v642 = vpack.c.bf16 %v641, %v641
        %v643 = vld [vmem:[#allocation8] sm:$0xf]
        %v644 = vld [vmem:[#allocation8 + $0x4] sm:$0xf]
        %v645 = vld [vmem:[#allocation8 + $0x8] sm:$0xf]
        %v646 = vld [vmem:[#allocation8 + $0xc] sm:$0xf]
        %v647 = vld [vmem:[#allocation8 + $0x10] sm:$0xf]
        %v648 = vld [vmem:[#allocation8 + $0x14] sm:$0xf]
        %v649 = vld [vmem:[#allocation8 + $0x18] sm:$0xf]
        %v650 = vld [vmem:[#allocation8 + $0x1c] sm:$0xf]
        %v651 = vld [vmem:[#allocation8 + $0x20] sm:$0xf]
        %v652 = vld [vmem:[#allocation8 + $0x24] sm:$0xf]
        %v653 = vld [vmem:[#allocation8 + $0x28] sm:$0xf]
        %v654 = vld [vmem:[#allocation8 + $0x2c] sm:$0xf]
        %v655 = vld [vmem:[#allocation8 + $0x30] sm:$0xf]
        %v656 = vld [vmem:[#allocation8 + $0x34] sm:$0xf]
        %v657 = vld [vmem:[#allocation8 + $0x38] sm:$0xf]
        %v658 = vld [vmem:[#allocation8 + $0x3c] sm:$0xf]
        %v659 = vld [vmem:[%s6] sm:$0x1]
        %v661 = vlaneseq
        %v662 = vshrl.u32 %v661, 7
        %v663 = vsub.s32 0, %v662
        %v664 = vrot.slane %v659, %v663
        %v682 = vunpack.c.l.b16 %v643
        %v683 = vunpack.c.l.b16 %v644
        %v684 = vunpack.c.l.b16 %v645
        %v685 = vunpack.c.l.b16 %v646
        %v686 = vunpack.c.l.b16 %v647
        %v687 = vunpack.c.l.b16 %v648
        %v688 = vunpack.c.l.b16 %v649
        %v689 = vunpack.c.l.b16 %v650
        %v690 = vunpack.c.l.b16 %v651
        %v691 = vunpack.c.l.b16 %v652
        %v692 = vunpack.c.l.b16 %v653
        %v693 = vunpack.c.l.b16 %v654
        %v694 = vunpack.c.l.b16 %v655
        %v695 = vunpack.c.l.b16 %v656
        %v696 = vunpack.c.l.b16 %v657
        %v697 = vunpack.c.l.b16 %v658
        %v698 = vpack.c.b16 %v683, %v682
        %v699 = vpack.c.b16 %v685, %v684
        %v700 = vpack.c.b16 %v687, %v686
        %v701 = vpack.c.b16 %v689, %v688
        %v702 = vpack.c.b16 %v691, %v690
        %v703 = vpack.c.b16 %v693, %v692
        %v704 = vpack.c.b16 %v695, %v694
        %v705 = vpack.c.b16 %v697, %v696
        %714 = vmatprep.subr.bf16.mxu0 0
        %715 = vmatpush1.bf16.msra.mxu0 %v698
        %716 = vmatprep.subr.bf16.mxu0 0
        %717 = vmatpush1.bf16.msra.mxu0 %v699
        %718 = vmatprep.subr.bf16.mxu0 0
        %719 = vmatpush1.bf16.msra.mxu0 %v700
        %720 = vmatprep.subr.bf16.mxu0 0
        %721 = vmatpush1.bf16.msra.mxu0 %v701
        %722 = vmatprep.subr.bf16.mxu0 0
        %723 = vmatpush1.bf16.msra.mxu0 %v702
        %724 = vmatprep.subr.bf16.mxu0 0
        %725 = vmatpush1.bf16.msra.mxu0 %v703
        %726 = vmatprep.subr.bf16.mxu0 0
        %727 = vmatpush1.bf16.msra.mxu0 %v704
        %728 = vmatprep.subr.bf16.mxu0 0
        %729 = vmatpush1.bf16.msra.mxu0 %v705
        %730 = vmatprep.subr.bf16.mxu0 0
        %731 = vmatpush1.bf16.msra.mxu0 0
        %732 = vmatprep.subr.bf16.mxu0 0
        %733 = vmatpush1.bf16.msra.mxu0 0
        %734 = vmatprep.subr.bf16.mxu0 0
        %735 = vmatpush1.bf16.msra.mxu0 0
        %736 = vmatprep.subr.bf16.mxu0 0
        %737 = vmatpush1.bf16.msra.mxu0 0
        %738 = vmatprep.subr.bf16.mxu0 0
        %739 = vmatpush1.bf16.msra.mxu0 0
        %740 = vmatprep.subr.bf16.mxu0 0
        %741 = vmatpush1.bf16.msra.mxu0 0
        %742 = vmatprep.subr.bf16.mxu0 0
        %743 = vmatpush1.bf16.msra.mxu0 0
        %744 = vmatprep.subr.bf16.mxu0 0
        %745 = vmatpush1.bf16.msra.mxu0 0
        %746 = vmatprep.mubr.bf16.mxu0 0
        %747 = vmatmul.mubr.bf16.gmra.mrb[0].mxu0 %v642
        %v748 = vpop.f32.mrb[0].mxu0
        %v749 = vadd.f32 %v664, %v748
        %v750 = vpop.f32.mrb[0].mxu0
        %v751 = vpop.f32.mrb[0].mxu0
        %v752 = vpop.f32.mrb[0].mxu0
        %753 = vdwg.mxu0
        %v754 = vtanh.pop %v749
        %v755 = vpack.c.bf16 %v754, %v754
        %v756 = vld [vmem:[#allocation10] sm:$0xf]
        %v757 = vld [vmem:[#allocation10 + $0x4] sm:$0xf]
        %v758 = vld [vmem:[#allocation10 + $0x8] sm:$0xf]
        %v759 = vld [vmem:[#allocation10 + $0xc] sm:$0xf]
        %v760 = vld [vmem:[#allocation10 + $0x10] sm:$0xf]
        %v761 = vld [vmem:[#allocation10 + $0x14] sm:$0xf]
        %v762 = vld [vmem:[#allocation10 + $0x18] sm:$0xf]
        %v763 = vld [vmem:[#allocation10 + $0x1c] sm:$0xf]
        %v764 = vld [vmem:[#allocation10 + $0x20] sm:$0xf]
        %v765 = vld [vmem:[#allocation10 + $0x24] sm:$0xf]
        %v766 = vld [vmem:[#allocation10 + $0x28] sm:$0xf]
        %v767 = vld [vmem:[#allocation10 + $0x2c] sm:$0xf]
        %v768 = vld [vmem:[#allocation10 + $0x30] sm:$0xf]
        %v769 = vld [vmem:[#allocation10 + $0x34] sm:$0xf]
        %v770 = vld [vmem:[#allocation10 + $0x38] sm:$0xf]
        %v771 = vld [vmem:[#allocation10 + $0x3c] sm:$0xf]
        %v772 = vld [vmem:[%s8] sm:$0x1]
        %v774 = vlaneseq
        %v775 = vshrl.u32 %v774, 7
        %v776 = vsub.s32 0, %v775
        %v777 = vrot.slane %v772, %v776
        %v795 = vunpack.c.l.b16 %v756
        %v796 = vunpack.c.l.b16 %v757
        %v797 = vunpack.c.l.b16 %v758
        %v798 = vunpack.c.l.b16 %v759
        %v799 = vunpack.c.l.b16 %v760
        %v800 = vunpack.c.l.b16 %v761
        %v801 = vunpack.c.l.b16 %v762
        %v802 = vunpack.c.l.b16 %v763
        %v803 = vunpack.c.l.b16 %v764
        %v804 = vunpack.c.l.b16 %v765
        %v805 = vunpack.c.l.b16 %v766
        %v806 = vunpack.c.l.b16 %v767
        %v807 = vunpack.c.l.b16 %v768
        %v808 = vunpack.c.l.b16 %v769
        %v809 = vunpack.c.l.b16 %v770
        %v810 = vunpack.c.l.b16 %v771
        %v811 = vpack.c.b16 %v796, %v795
        %v812 = vpack.c.b16 %v798, %v797
        %v813 = vpack.c.b16 %v800, %v799
        %v814 = vpack.c.b16 %v802, %v801
        %v815 = vpack.c.b16 %v804, %v803
        %v816 = vpack.c.b16 %v806, %v805
        %v817 = vpack.c.b16 %v808, %v807
        %v818 = vpack.c.b16 %v810, %v809
        %827 = vmatprep.subr.bf16.mxu0 0
        %828 = vmatpush1.bf16.msra.mxu0 %v811
        %829 = vmatprep.subr.bf16.mxu0 0
        %830 = vmatpush1.bf16.msra.mxu0 %v812
        %831 = vmatprep.subr.bf16.mxu0 0
        %832 = vmatpush1.bf16.msra.mxu0 %v813
        %833 = vmatprep.subr.bf16.mxu0 0
        %834 = vmatpush1.bf16.msra.mxu0 %v814
        %835 = vmatprep.subr.bf16.mxu0 0
        %836 = vmatpush1.bf16.msra.mxu0 %v815
        %837 = vmatprep.subr.bf16.mxu0 0
        %838 = vmatpush1.bf16.msra.mxu0 %v816
        %839 = vmatprep.subr.bf16.mxu0 0
        %840 = vmatpush1.bf16.msra.mxu0 %v817
        %841 = vmatprep.subr.bf16.mxu0 0
        %842 = vmatpush1.bf16.msra.mxu0 %v818
        %843 = vmatprep.subr.bf16.mxu0 0
        %844 = vmatpush1.bf16.msra.mxu0 0
        %845 = vmatprep.subr.bf16.mxu0 0
        %846 = vmatpush1.bf16.msra.mxu0 0
        %847 = vmatprep.subr.bf16.mxu0 0
        %848 = vmatpush1.bf16.msra.mxu0 0
        %849 = vmatprep.subr.bf16.mxu0 0
        %850 = vmatpush1.bf16.msra.mxu0 0
        %851 = vmatprep.subr.bf16.mxu0 0
        %852 = vmatpush1.bf16.msra.mxu0 0
        %853 = vmatprep.subr.bf16.mxu0 0
        %854 = vmatpush1.bf16.msra.mxu0 0
        %855 = vmatprep.subr.bf16.mxu0 0
        %856 = vmatpush1.bf16.msra.mxu0 0
        %857 = vmatprep.subr.bf16.mxu0 0
        %858 = vmatpush1.bf16.msra.mxu0 0
        %859 = vmatprep.mubr.bf16.mxu0 0
        %860 = vmatmul.mubr.bf16.gmra.mrb[0].mxu0 %v755
        %v861 = vpop.f32.mrb[0].mxu0
        %v862 = vadd.f32 %v777, %v861
        %v863 = vpop.f32.mrb[0].mxu0
        %v864 = vpop.f32.mrb[0].mxu0
        %v865 = vpop.f32.mrb[0].mxu0
        %866 = vdwg.mxu0
        %867 = vst [vmem:[%s405] sm:$0xf] %v642
        %v868 = vpack.c.bf16 %v862, %v862
        %869 = vst [vmem:[%s405 + $0x4] sm:$0xf] %v868
        %s870 = sand.u32 %s230, 1
        %s871 = scalar_lea.sflag [#allocation4], %s870
        %s872 = sand.u32 %s230, 1
        %s873 = smul.addr %s872, 8
        %s874 = scalar_lea.vmem [#allocation11], %s873
        // Predicated region
        $region77: #{tpu_custom_call.1} parent=55 // pred_check
          %p875 = pneg %p240
        $region78: #{tpu_custom_call.1} parent=55 // pred_check_branch
          %877 = sbr.rel (%p875) target = $region80
        $region79: #{tpu_custom_call.1} parent=55 // pred_region
          %s879 = ssub.s32 128, 128
          %880 = vsyncadd %s871, %s879
          %s881 = smul.addr %s28, 2
          %s882 = smul.addr %s881, 64
          %s883 = scalar_lea.hbm %s9, %s882
          %s885 = sshll.u32 %s874, 4
          %s886 = int_to_ptr.vmem [resolvable:$true] %s885
          %888 = dma.vmem_to_hbm [thread:$0]  %s886, 128, %s883, %s871
        $region80: #{tpu_custom_call.1} parent=55 // pred_fallthru
          _
      $region56: #{tpu_custom_call.1} parent=5 // pred_fallthru
        _
      %p889 = scmp.le.s32.totalorder 2, %s23
      // Predicated region
      $region81: #{tpu_custom_call.1} parent=5 // pred_check
        %p890 = pneg %p889
      $region82: #{tpu_custom_call.1} parent=5 // pred_check_branch
        %892 = sbr.rel (%p890) target = $region84
      $region83: #{tpu_custom_call.1} parent=5 // pred_region
        %s893 = ssub.s32 %s23, 2
        // Predicated region
        $region85: #{tpu_custom_call.1} parent=83 // pred_check
          %p894 = pneg %p246
        $region86: #{tpu_custom_call.1} parent=83 // pred_check_branch
          %896 = sbr.rel (%p894) target = $region88
        $region87: #{tpu_custom_call.1} parent=83 // pred_region
          %s897 = sand.u32 %s231, 1
          %s898 = scalar_lea.sflag [#allocation4], %s897
          %s899 = sand.u32 %s231, 1
          %s900 = smul.addr %s899, 8
          %s901 = scalar_lea.vmem [#allocation11], %s900
          %902 = dma.done %s898, 128
        $region88: #{tpu_custom_call.1} parent=83 // pred_fallthru
          _
      $region84: #{tpu_custom_call.1} parent=5 // pred_fallthru
        _
    $region6: #{tpu_custom_call.1} parent=1 // loop_footer
      %s27 = sadd.s32 1, %s23
    $region7: #{tpu_custom_call.1} parent=1 // loop_footer_branch
      %22 = sbr.rel target = $region3
    $region8: #{tpu_custom_call.1} parent=1 // loop_exit
      _
    %903 = vsyncpa [#allocation3], 1
    %s904 = scalar_lea.sflag [#allocation3], 1
    %905 = vsyncpa %s904, 1
    %906 = vsyncpa [#allocation6], 1
    %907 = vsyncpa [#allocation9], 1
    %908 = vsyncpa [#allocation4], 1
    %s909 = scalar_lea.sflag [#allocation4], 1
    %910 = vsyncpa %s909, 1

</llo_original>
